<compile_context>
chip_gen: v5e
topology: v5e:2x2
jax: 0.10.0
libtpu: 0.0.40
codegen_flags: <defaults>
</compile_context>

<pallas_src>
import functools

import jax
import jax.numpy as jnp
from jax.experimental import pallas as pl
from jax.experimental.pallas import tpu as pltpu


def _round_up(v, m):
    return ((v + m - 1) // m) * m


def mlp_kernel(x_ref, w1_ref, b1_ref, w2_ref, b2_ref, w3_ref, b3_ref, o_ref):
    x = x_ref[...]                                                        # (TB, D_pad)

    # layer1 + ReLU  (f32 accumulation on the MXU, f32 activations)
    h1 = jnp.dot(x, w1_ref[...], preferred_element_type=jnp.float32) + b1_ref[...]
    h1 = jnp.maximum(h1, 0.0)                                             # (TB, 128)

    # layer2 + ReLU
    h2 = jnp.dot(h1.astype(w2_ref.dtype), w2_ref[...],
                 preferred_element_type=jnp.float32) + b2_ref[...]
    h2 = jnp.maximum(h2, 0.0)                                             # (TB, 128)

    # layer3 + softmax over the real 3 classes (w3/b3 are not column-padded,
    # so no -inf masking is needed).
    logits = jnp.dot(h2.astype(w3_ref.dtype), w3_ref[...],
                     preferred_element_type=jnp.float32) + b3_ref[...]    # (TB, 3)
    m = jnp.max(logits, axis=-1, keepdims=True)
    e = jnp.exp(logits - m)
    denom = jnp.sum(e, axis=-1, keepdims=True)
    o_ref[...] = (e * pl.reciprocal(denom, approx=False)).astype(o_ref.dtype)


def iris_mlp_forward(x, params, *, block_rows=512, compute_dtype=jnp.float32):
    """x: (B, D) f32; params: (w1,b1,w2,b2,w3,b3) with w stored (in, out)."""
    w1, b1, w2, b2, w3, b3 = params
    B, D = x.shape
    H1, H2, C = w1.shape[1], w2.shape[1], w3.shape[1]

    # Tile-aligned padded dims (zero padding is exact through matmul+ReLU).
    D_pad = _round_up(D, 8)
    H1_pad = _round_up(H1, 128)
    H2_pad = _round_up(H2, 128)

    # Batch tile: big enough to amortize per-step overhead, multiple of 8 sublanes.
    TB = min(block_rows, _round_up(B, 8))
    B_pad = _round_up(B, TB)

    x_p = jnp.zeros((B_pad, D_pad), compute_dtype).at[:B, :D].set(x.astype(compute_dtype))
    w1_p = jnp.zeros((D_pad, H1_pad), compute_dtype).at[:D, :H1].set(w1.astype(compute_dtype))
    b1_p = jnp.zeros((1, H1_pad), jnp.float32).at[:, :H1].set(b1)
    w2_p = jnp.zeros((H1_pad, H2_pad), compute_dtype).at[:H1, :H2].set(w2.astype(compute_dtype))
    b2_p = jnp.zeros((1, H2_pad), jnp.float32).at[:, :H2].set(b2)
    w3_p = jnp.zeros((H2_pad, C), compute_dtype).at[:H2, :].set(w3.astype(compute_dtype))
    b3_p = b3.astype(jnp.float32)                                         # (1, C)

    const = lambda shp: pl.BlockSpec(shp, lambda i: (0, 0))               # resident across grid

    out = pl.pallas_call(
        mlp_kernel,
        out_shape=jax.ShapeDtypeStruct((B_pad, C), jnp.float32),
        grid=(B_pad // TB,),
        in_specs=[
            pl.BlockSpec((TB, D_pad), lambda i: (i, 0)),                  # x: pipelined over batch
            const((D_pad, H1_pad)), const((1, H1_pad)),
            const((H1_pad, H2_pad)), const((1, H2_pad)),
            const((H2_pad, C)), const((1, C)),
        ],
        out_specs=pl.BlockSpec((TB, C), lambda i: (i, 0)),
        compiler_params=pltpu.CompilerParams(
            dimension_semantics=("parallel",),                            # megacore on v7x
        ),
    )(x_p, w1_p, b1_p, w2_p, b2_p, w3_p, b3_p)

    return out[:B]


def init_params(key, input_dim):
    # Deterministic synthetic init (PyTorch-like uniform bounds), shapes from __init__.
    ks = jax.random.split(key, 6)

    def linear(kw, kb, fan_in, fan_out):
        bound = 1.0 / jnp.sqrt(fan_in)
        w = jax.random.uniform(kw, (fan_in, fan_out), jnp.float32, -bound, bound)
        b = jax.random.uniform(kb, (1, fan_out), jnp.float32, -bound, bound)
        return w, b

    w1, b1 = linear(ks[0], ks[1], input_dim, 50)
    w2, b2 = linear(ks[2], ks[3], 50, 20)
    w3, b3 = linear(ks[4], ks[5], 20, 3)
    return (w1, b1, w2, b2, w3, b3)


def _reference(x, params):
    w1, b1, w2, b2, w3, b3 = params
    h1 = jnp.maximum(x @ w1 + b1, 0.0)
    h2 = jnp.maximum(h1 @ w2 + b2, 0.0)
    return jax.nn.softmax(h2 @ w3 + b3, axis=-1)


if __name__ == "__main__":
    key = jax.random.PRNGKey(0)
    k_x, k_x2, k_p = jax.random.split(key, 3)

    input_dim = 4          # iris features
    params = init_params(k_p, input_dim)
    fwd = jax.jit(functools.partial(iris_mlp_forward, block_rows=512))

    # Small batch (single grid step).
    batch = 8
    x = jax.random.normal(k_x, (batch, input_dim), jnp.float32)
    out = jax.block_until_ready(fwd(x, params))
    assert out.shape == (batch, 3)
    assert jnp.allclose(jnp.sum(out, axis=-1), 1.0, atol=1e-5)
    assert jnp.allclose(out, _reference(x, params), atol=2e-3, rtol=2e-3)

    # Larger batch exercising multiple grid steps + edge padding.
    fwd_small_blocks = jax.jit(functools.partial(iris_mlp_forward, block_rows=128))
    batch2 = 300
    x2 = jax.random.normal(k_x2, (batch2, input_dim), jnp.float32)
    out2 = jax.block_until_ready(fwd_small_blocks(x2, params))
    assert out2.shape == (batch2, 3)
    assert jnp.allclose(jnp.sum(out2, axis=-1), 1.0, atol=1e-5)
    assert jnp.allclose(out2, _reference(x2, params), atol=2e-3, rtol=2e-3)

    print("KERNEL_OK")
</pallas_src>

<mosaic_0001>
module attributes {stable_mosaic.version = 11 : i64} {
  func.func @mlp_kernel(%arg0: i32, %arg1: memref<8x8xf32, #tpu.memory_space<vmem>>, %arg2: memref<8x128xf32, #tpu.memory_space<vmem>>, %arg3: memref<1x128xf32, #tpu.memory_space<vmem>>, %arg4: memref<128x128xf32, #tpu.memory_space<vmem>>, %arg5: memref<1x128xf32, #tpu.memory_space<vmem>>, %arg6: memref<128x3xf32, #tpu.memory_space<vmem>>, %arg7: memref<1x3xf32, #tpu.memory_space<vmem>>, %arg8: memref<8x3xf32, #tpu.memory_space<vmem>>) attributes {dimension_semantics = [#tpu.dimension_semantics<parallel>], iteration_bounds = array<i64: 1>, scalar_prefetch = 0 : i64, scratch_operands = 0 : i64, tpu.core_type = #tpu.core_type<tc>, window_params = [{transform_indices = @transform_0, window_bounds = array<i64: 8, 8>}, {pipeline_mode = #tpu.pipeline_mode<synchronous>, transform_indices = @transform_1, window_bounds = array<i64: 8, 128>}, {pipeline_mode = #tpu.pipeline_mode<synchronous>, transform_indices = @transform_2, window_bounds = array<i64: 1, 128>}, {pipeline_mode = #tpu.pipeline_mode<synchronous>, transform_indices = @transform_3, window_bounds = array<i64: 128, 128>}, {pipeline_mode = #tpu.pipeline_mode<synchronous>, transform_indices = @transform_4, window_bounds = array<i64: 1, 128>}, {pipeline_mode = #tpu.pipeline_mode<synchronous>, transform_indices = @transform_5, window_bounds = array<i64: 128, 3>}, {pipeline_mode = #tpu.pipeline_mode<synchronous>, transform_indices = @transform_6, window_bounds = array<i64: 1, 3>}, {transform_indices = @transform_7, window_bounds = array<i64: 8, 3>}]} {
    %c0 = arith.constant 0 : index
    %c0_0 = arith.constant 0 : index
    %0 = vector.load %arg1[%c0, %c0_0] : memref<8x8xf32, #tpu.memory_space<vmem>>, vector<8x8xf32>
    %c0_1 = arith.constant 0 : index
    %c0_2 = arith.constant 0 : index
    %1 = vector.load %arg2[%c0_1, %c0_2] : memref<8x128xf32, #tpu.memory_space<vmem>>, vector<8x128xf32>
    %cst = arith.constant dense<0.000000e+00> : vector<8x128xf32>
    %2 = tpu.matmul %0, %1, %cst {dimension_numbers = #tpu.dot_dimension_numbers<[1], [0], [0], [1], [0, 0, 1, 1], [], []>} : vector<8x8xf32>, vector<8x128xf32>, vector<8x128xf32> -> vector<8x128xf32>
    %c0_3 = arith.constant 0 : index
    %c0_4 = arith.constant 0 : index
    %3 = vector.load %arg3[%c0_3, %c0_4] : memref<1x128xf32, #tpu.memory_space<vmem>>, vector<1x128xf32>
    %4 = vector.broadcast %3 : vector<1x128xf32> to vector<8x128xf32>
    %5 = arith.addf %2, %4 : vector<8x128xf32>
    %cst_5 = arith.constant 0.000000e+00 : f32
    %6 = vector.broadcast %cst_5 : f32 to vector<8x128xf32>
    %7 = arith.maximumf %5, %6 : vector<8x128xf32>
    %c0_6 = arith.constant 0 : index
    %c0_7 = arith.constant 0 : index
    %8 = vector.load %arg4[%c0_6, %c0_7] : memref<128x128xf32, #tpu.memory_space<vmem>>, vector<128x128xf32>
    %cst_8 = arith.constant dense<0.000000e+00> : vector<8x128xf32>
    %9 = tpu.matmul %7, %8, %cst_8 {dimension_numbers = #tpu.dot_dimension_numbers<[1], [0], [0], [1], [0, 0, 1, 1], [], []>} : vector<8x128xf32>, vector<128x128xf32>, vector<8x128xf32> -> vector<8x128xf32>
    %c0_9 = arith.constant 0 : index
    %c0_10 = arith.constant 0 : index
    %10 = vector.load %arg5[%c0_9, %c0_10] : memref<1x128xf32, #tpu.memory_space<vmem>>, vector<1x128xf32>
    %11 = vector.broadcast %10 : vector<1x128xf32> to vector<8x128xf32>
    %12 = arith.addf %9, %11 : vector<8x128xf32>
    %cst_11 = arith.constant 0.000000e+00 : f32
    %13 = vector.broadcast %cst_11 : f32 to vector<8x128xf32>
    %14 = arith.maximumf %12, %13 : vector<8x128xf32>
    %c0_12 = arith.constant 0 : index
    %c0_13 = arith.constant 0 : index
    %15 = vector.load %arg6[%c0_12, %c0_13] : memref<128x3xf32, #tpu.memory_space<vmem>>, vector<128x3xf32>
    %cst_14 = arith.constant dense<0.000000e+00> : vector<8x3xf32>
    %16 = tpu.matmul %14, %15, %cst_14 {dimension_numbers = #tpu.dot_dimension_numbers<[1], [0], [0], [1], [0, 0, 1, 1], [], []>} : vector<8x128xf32>, vector<128x3xf32>, vector<8x3xf32> -> vector<8x3xf32>
    %c0_15 = arith.constant 0 : index
    %c0_16 = arith.constant 0 : index
    %17 = vector.load %arg7[%c0_15, %c0_16] : memref<1x3xf32, #tpu.memory_space<vmem>>, vector<1x3xf32>
    %18 = vector.broadcast %17 : vector<1x3xf32> to vector<8x3xf32>
    %19 = arith.addf %16, %18 : vector<8x3xf32>
    %cst_17 = arith.constant dense<0xFF800000> : vector<8xf32>
    %20 = vector.multi_reduction <maximumf>, %19, %cst_17 [1] : vector<8x3xf32> to vector<8xf32>
    %21 = vector.shape_cast %20 : vector<8xf32> to vector<8x1xf32>
    %22 = vector.broadcast %21 : vector<8x1xf32> to vector<8x3xf32>
    %23 = arith.subf %19, %22 : vector<8x3xf32>
    %24 = math.exp %23 : vector<8x3xf32>
    %cst_18 = arith.constant dense<0.000000e+00> : vector<8xf32>
    %25 = vector.multi_reduction <add>, %24, %cst_18 [1] : vector<8x3xf32> to vector<8xf32>
    %26 = vector.shape_cast %25 : vector<8xf32> to vector<8x1xf32>
    %27 = tpu.reciprocal %26 : vector<8x1xf32> -> vector<8x1xf32>
    %28 = vector.broadcast %27 : vector<8x1xf32> to vector<8x3xf32>
    %29 = arith.mulf %24, %28 : vector<8x3xf32>
    %c0_19 = arith.constant 0 : index
    %c0_20 = arith.constant 0 : index
    %30 = vector.load %arg8[%c0_19, %c0_20] : memref<8x3xf32, #tpu.memory_space<vmem>>, vector<8x3xf32>
    tpu.vector_store %arg8[%c0_19, %c0_20], %29 {strides = array<i32>} : memref<8x3xf32, #tpu.memory_space<vmem>>, vector<8x3xf32>,
    return
  }
  func.func @transform_0(%arg0: i32) -> (i32, i32) {
    %c0_i32 = arith.constant 0 : i32
    %c0_i32_0 = arith.constant 0 : i32
    return %arg0, %c0_i32 : i32, i32
  }
  func.func @transform_1(%arg0: i32) -> (i32, i32) {
    %c0_i32 = arith.constant 0 : i32
    %c0_i32_0 = arith.constant 0 : i32
    %c0_i32_1 = arith.constant 0 : i32
    return %c0_i32, %c0_i32_0 : i32, i32
  }
  func.func @transform_2(%arg0: i32) -> (i32, i32) {
    %c0_i32 = arith.constant 0 : i32
    %c0_i32_0 = arith.constant 0 : i32
    %c0_i32_1 = arith.constant 0 : i32
    return %c0_i32, %c0_i32_0 : i32, i32
  }
  func.func @transform_3(%arg0: i32) -> (i32, i32) {
    %c0_i32 = arith.constant 0 : i32
    %c0_i32_0 = arith.constant 0 : i32
    %c0_i32_1 = arith.constant 0 : i32
    return %c0_i32, %c0_i32_0 : i32, i32
  }
  func.func @transform_4(%arg0: i32) -> (i32, i32) {
    %c0_i32 = arith.constant 0 : i32
    %c0_i32_0 = arith.constant 0 : i32
    %c0_i32_1 = arith.constant 0 : i32
    return %c0_i32, %c0_i32_0 : i32, i32
  }
  func.func @transform_5(%arg0: i32) -> (i32, i32) {
    %c0_i32 = arith.constant 0 : i32
    %c0_i32_0 = arith.constant 0 : i32
    %c0_i32_1 = arith.constant 0 : i32
    return %c0_i32, %c0_i32_0 : i32, i32
  }
  func.func @transform_6(%arg0: i32) -> (i32, i32) {
    %c0_i32 = arith.constant 0 : i32
    %c0_i32_0 = arith.constant 0 : i32
    %c0_i32_1 = arith.constant 0 : i32
    return %c0_i32, %c0_i32_0 : i32, i32
  }
  func.func @transform_7(%arg0: i32) -> (i32, i32) {
    %c0_i32 = arith.constant 0 : i32
    %c0_i32_0 = arith.constant 0 : i32
    return %arg0, %c0_i32 : i32, i32
  }
}

</mosaic_0001>

<llo_original>
// kernel: iris_mlp_forward.1
$region0: #{iris_mlp_forward.1}
  #allocation0 [shape = 'u32[]', space=smem, size = 0x4, offset = 0x4, fixed_abs, tag = 'smem constant byte address 0x4 - core index']
  #allocation1 [shape = 'u32[72,128]{1,0:T(1,128)}', space=vmem, size = 0x9000, scoped, tag = 'internal scratch']
  %s0 = inlined_call_operand.vmem [shape: f32[8,8], index: 0, kind: input, shape index: {}]
  %s1 = inlined_call_operand.vmem [shape: f32[8,128], index: 1, kind: input, shape index: {}]
  %s2 = inlined_call_operand.vmem [shape: f32[1,128], index: 2, kind: input, shape index: {}]
  %s3 = inlined_call_operand.vmem [shape: f32[128,128], index: 3, kind: input, shape index: {}]
  %s4 = inlined_call_operand.vmem [shape: f32[1,128], index: 4, kind: input, shape index: {}]
  %s5 = inlined_call_operand.vmem [shape: f32[128,3], index: 5, kind: input, shape index: {}]
  %s6 = inlined_call_operand.vmem [shape: f32[1,3], index: 6, kind: input, shape index: {}]
  %s7 = inlined_call_operand.vmem [shape: f32[8,3], index: 7, kind: output, shape index: {}]
  %s8 = sld [smem:[#allocation0]]
  $region38: #{iris_mlp_forward.1} parent=0
    _
  %s10 = ssub.s32 1, %s8
  %s11 = scalar_select 0, %s10, %s8
  // Predicated region
  $region2: #{iris_mlp_forward.1} parent=0 // pred_check
    _
  $region3: #{iris_mlp_forward.1} parent=0 // pred_check_branch
    %13 = sbr.rel (0) target = $region5
  $region4: #{iris_mlp_forward.1} parent=0 // pred_region
    _
  $region5: #{iris_mlp_forward.1} parent=0 // pred_fallthru
    _
  // Predicated region
  $region6: #{iris_mlp_forward.1} parent=0 // pred_check
    _
  $region7: #{iris_mlp_forward.1} parent=0 // pred_check_branch
    %15 = sbr.rel (0) target = $region9
  $region8: #{iris_mlp_forward.1} parent=0 // pred_region
    _
  $region9: #{iris_mlp_forward.1} parent=0 // pred_fallthru
    _
  // Predicated region
  $region10: #{iris_mlp_forward.1} parent=0 // pred_check
    _
  $region11: #{iris_mlp_forward.1} parent=0 // pred_check_branch
    %17 = sbr.rel (0) target = $region13
  $region12: #{iris_mlp_forward.1} parent=0 // pred_region
    _
  $region13: #{iris_mlp_forward.1} parent=0 // pred_fallthru
    _
  // Predicated region
  $region14: #{iris_mlp_forward.1} parent=0 // pred_check
    _
  $region15: #{iris_mlp_forward.1} parent=0 // pred_check_branch
    %19 = sbr.rel (0) target = $region17
  $region16: #{iris_mlp_forward.1} parent=0 // pred_region
    _
  $region17: #{iris_mlp_forward.1} parent=0 // pred_fallthru
    _
  // Predicated region
  $region18: #{iris_mlp_forward.1} parent=0 // pred_check
    _
  $region19: #{iris_mlp_forward.1} parent=0 // pred_check_branch
    %21 = sbr.rel (0) target = $region21
  $region20: #{iris_mlp_forward.1} parent=0 // pred_region
    _
  $region21: #{iris_mlp_forward.1} parent=0 // pred_fallthru
    _
  // Predicated region
  $region22: #{iris_mlp_forward.1} parent=0 // pred_check
    _
  $region23: #{iris_mlp_forward.1} parent=0 // pred_check_branch
    %23 = sbr.rel (0) target = $region25
  $region24: #{iris_mlp_forward.1} parent=0 // pred_region
    _
  $region25: #{iris_mlp_forward.1} parent=0 // pred_fallthru
    _
  // Predicated region
  $region26: #{iris_mlp_forward.1} parent=0 // pred_check
    _
  $region27: #{iris_mlp_forward.1} parent=0 // pred_check_branch
    %25 = sbr.rel (0) target = $region29
  $region28: #{iris_mlp_forward.1} parent=0 // pred_region
    _
  $region29: #{iris_mlp_forward.1} parent=0 // pred_fallthru
    _
  %v26 = vld [vmem:[%s0] sm:$0xff]
  %v27 = vld [vmem:[%s1] sm:$0xff]
  %v28 = vld [vmem:[%s2] sm:$0x1]
  %v30 = vperm.slane %v28, 0
  %vm32 = vcmask 64512
  %v34 = vsel %vm32, %v26, 0
  %36 = vmatpush.msra.mxu0 0.0
  %37 = vmatpush.msra.mxu0 0.0
  %38 = vmatpush.msra.mxu0 0.0
  %39 = vmatpush.msra.mxu0 0.0
  %40 = vmatpush.msra.mxu0 0.0
  %41 = vmatpush.msra.mxu0 0.0
  %42 = vmatpush.msra.mxu0 0.0
  %43 = vmatpush.msra.mxu0 0.0
  %44 = vmatpush.msra.mxu0 0.0
  %45 = vmatpush.msra.mxu0 0.0
  %46 = vmatpush.msra.mxu0 0.0
  %47 = vmatpush.msra.mxu0 0.0
  %48 = vmatpush.msra.mxu0 0.0
  %49 = vmatpush.msra.mxu0 0.0
  %50 = vmatpush.msra.mxu0 0.0
  %51 = vmatpush.msra.mxu0 %v27
  %52 = vmatmul.f32.gmra.mxu0 %v34
  %v53 = vpop.f32.mrf.mxu0
  %v54 = vadd.f32 %v30, %v53
  %55 = vdwg.mxu0
  %v56 = vmax.f32 %v54, 0.0
  %v57 = vld [vmem:[%s3] sm:$0xff]
  %v58 = vld [vmem:[%s3 + $0x8] sm:$0xff]
  %v59 = vld [vmem:[%s3 + $0x10] sm:$0xff]
  %v60 = vld [vmem:[%s3 + $0x18] sm:$0xff]
  %v61 = vld [vmem:[%s3 + $0x20] sm:$0xff]
  %v62 = vld [vmem:[%s3 + $0x28] sm:$0xff]
  %v63 = vld [vmem:[%s3 + $0x30] sm:$0xff]
  %v64 = vld [vmem:[%s3 + $0x38] sm:$0xff]
  %v65 = vld [vmem:[%s3 + $0x40] sm:$0xff]
  %v66 = vld [vmem:[%s3 + $0x48] sm:$0xff]
  %v67 = vld [vmem:[%s3 + $0x50] sm:$0xff]
  %v68 = vld [vmem:[%s3 + $0x58] sm:$0xff]
  %v69 = vld [vmem:[%s3 + $0x60] sm:$0xff]
  %v70 = vld [vmem:[%s3 + $0x68] sm:$0xff]
  %v71 = vld [vmem:[%s3 + $0x70] sm:$0xff]
  %v72 = vld [vmem:[%s3 + $0x78] sm:$0xff]
  %v73 = vld [vmem:[%s4] sm:$0x1]
  %v75 = vperm.slane %v73, 0
  %77 = vmatpush.msra.mxu0 %v72
  %78 = vmatpush.msra.mxu0 %v71
  %79 = vmatpush.msra.mxu0 %v70
  %80 = vmatpush.msra.mxu0 %v69
  %81 = vmatpush.msra.mxu0 %v68
  %82 = vmatpush.msra.mxu0 %v67
  %83 = vmatpush.msra.mxu0 %v66
  %84 = vmatpush.msra.mxu0 %v65
  %85 = vmatpush.msra.mxu0 %v64
  %86 = vmatpush.msra.mxu0 %v63
  %87 = vmatpush.msra.mxu0 %v62
  %88 = vmatpush.msra.mxu0 %v61
  %89 = vmatpush.msra.mxu0 %v60
  %90 = vmatpush.msra.mxu0 %v59
  %91 = vmatpush.msra.mxu0 %v58
  %92 = vmatpush.msra.mxu0 %v57
  %93 = vmatmul.f32.gmra.mxu0 %v56
  %v94 = vpop.f32.mrf.mxu0
  %v95 = vadd.f32 %v75, %v94
  %96 = vdwg.mxu0
  %v97 = vmax.f32 %v95, 0.0
  %v98 = vld [vmem:[%s5] sm:$0xff]
  %v99 = vld [vmem:[%s5 + $0x8] sm:$0xff]
  %v100 = vld [vmem:[%s5 + $0x10] sm:$0xff]
  %v101 = vld [vmem:[%s5 + $0x18] sm:$0xff]
  %v102 = vld [vmem:[%s5 + $0x20] sm:$0xff]
  %v103 = vld [vmem:[%s5 + $0x28] sm:$0xff]
  %v104 = vld [vmem:[%s5 + $0x30] sm:$0xff]
  %v105 = vld [vmem:[%s5 + $0x38] sm:$0xff]
  %v106 = vld [vmem:[%s5 + $0x40] sm:$0xff]
  %v107 = vld [vmem:[%s5 + $0x48] sm:$0xff]
  %v108 = vld [vmem:[%s5 + $0x50] sm:$0xff]
  %v109 = vld [vmem:[%s5 + $0x58] sm:$0xff]
  %v110 = vld [vmem:[%s5 + $0x60] sm:$0xff]
  %v111 = vld [vmem:[%s5 + $0x68] sm:$0xff]
  %v112 = vld [vmem:[%s5 + $0x70] sm:$0xff]
  %v113 = vld [vmem:[%s5 + $0x78] sm:$0xff]
  %v114 = vld [vmem:[%s6] sm:$0x1]
  %v116 = vperm.slane %v114, 0
  %118 = vmatpush.msra.mxu0 %v113
  %119 = vmatpush.msra.mxu0 %v112
  %120 = vmatpush.msra.mxu0 %v111
  %121 = vmatpush.msra.mxu0 %v110
  %122 = vmatpush.msra.mxu0 %v109
  %123 = vmatpush.msra.mxu0 %v108
  %124 = vmatpush.msra.mxu0 %v107
  %125 = vmatpush.msra.mxu0 %v106
  %126 = vmatpush.msra.mxu0 %v105
  %127 = vmatpush.msra.mxu0 %v104
  %128 = vmatpush.msra.mxu0 %v103
  %129 = vmatpush.msra.mxu0 %v102
  %130 = vmatpush.msra.mxu0 %v101
  %131 = vmatpush.msra.mxu0 %v100
  %132 = vmatpush.msra.mxu0 %v99
  %133 = vmatpush.msra.mxu0 %v98
  %134 = vmatmul.f32.gmra.mxu0 %v97
  %v135 = vpop.f32.mrf.mxu0
  %v136 = vadd.f32 %v116, %v135
  %137 = vdwg.mxu0
  %vm138 = vcmask 23552
  %v139 = vsel %vm138, %v136, -inf
  %140 = vmax.xlane.f32.xlu0 %v139
  %v141 = vpop.xlane.xlu0 %140
  %v142 = vsub.f32 %v136, %v141
  %v143 = vmul.f32 %v142, 1.442695
  %v144 = vpow.pop %v143
  %v145 = vsel %vm138, %v144, 0.0
  %146 = vadd.xlane.f32.xlu0 %v145
  %v147 = vpop.xlane.xlu0 %146
  %v148 = vrcp.pop %v147
  %v149 = vmul.f32 %v147, %v148
  %v150 = vsub.f32 1.0, %v149
  %v151 = vmul.f32 %v148, %v150
  %v152 = vadd.f32 %v148, %v151
  %vm153 = vweird.f32 %v147
  %vm154 = vweird.f32 %v148
  %vm155 = vmor %vm153, %vm154
  %v156 = vsel %vm155, %v148, %v152
  %v157 = vand.u32 2147483647, %v147
  %vm158 = vcmp.eq.f32.partialorder %v157, 8.507059e+37
  %v159 = vand.u32 %v147, 2147483648
  %v160 = vor.u32 1.1754944e-38, %v159
  %v161 = vsel %vm158, %v160, %v156
  %v162 = vmul.f32 %v144, %v161
  %163 = vst.msk [vmem:[%s7] sm:$0xff] %vm138, %v162
  // Predicated region
  $region30: #{iris_mlp_forward.1} parent=0 // pred_check
    _
  $region31: #{iris_mlp_forward.1} parent=0 // pred_check_branch
    %165 = sbr.rel (0) target = $region33
  $region32: #{iris_mlp_forward.1} parent=0 // pred_region
    _
  $region33: #{iris_mlp_forward.1} parent=0 // pred_fallthru
    _
  // Predicated region
  $region34: #{iris_mlp_forward.1} parent=0 // pred_check
    _
  $region35: #{iris_mlp_forward.1} parent=0 // pred_check_branch
    %167 = sbr.rel (0) target = $region37
  $region36: #{iris_mlp_forward.1} parent=0 // pred_region
    _
  $region37: #{iris_mlp_forward.1} parent=0 // pred_fallthru
    _

</llo_original>
